<compile_context>
chip_gen: v6e
topology: v6e:2x2x1
jax: 0.10.0
libtpu: 0.0.40
codegen_flags: <defaults>
</compile_context>

<pallas_src>
import jax
import jax.numpy as jnp
from jax.experimental import pallas as pl
from jax.experimental.pallas import tpu as pltpu  # noqa: F401  (TPU backend)

# ----------------------------- configuration --------------------------------
B, C_IN, H, W = 2, 3, 16, 16          # input images (NCHW)
KH = KW = 3
STRIDE, PAD = 2, 1
K_RAW = C_IN * KH * KW                # 27
K_PAD = 32                            # lane-friendly padded contraction dim
C_FEAT = 32                           # backbone feature channels
Q = 16                                # number of DINO queries
T = 8                                 # number of text tokens (logit dim)
V = 64                                # synthetic tf-idf vocab size
NCLS = 8                              # number of classes in class_info

HO = (H + 2 * PAD - KH) // STRIDE + 1  # 8
WO = (W + 2 * PAD - KW) // STRIDE + 1  # 8
S_SPAT = HO * WO                       # 64 spatial positions per image
M_ROWS = B * S_SPAT                    # 128 patch rows
BQ = B * Q                             # 32 query rows

DINO_BOX_THRESHOLD = 0.30
DINO_COS_SIM = 0.10

IMAGENET_MEAN = (0.485, 0.456, 0.406)
IMAGENET_STD = (0.229, 0.224, 0.225)


# ------------------------------ Pallas kernel --------------------------------
def _fused_kernel(patches_ref, wy_ref, by_ref, wd_ref, bd_ref, attn_ref,
                  wl_ref, bl_ref, wb_ref, bb_ref, scale_ref,
                  wv_ref, bv_ref, ct_ref, icn_ref,
                  yolo_ref, det_ref):
    patches = patches_ref[...]                                   # bf16 [M, K_PAD]

    # --- yolo conv surrogate on raw pixels (MXU, f32 accumulate) ------------
    yolo = jnp.dot(patches, wy_ref[...], preferred_element_type=jnp.float32)
    yolo_ref[...] = jnp.maximum(yolo + by_ref[...], 0.0)         # f32 [M, C_FEAT]

    # --- dino conv surrogate (ImageNet normalization folded into W/b) -------
    dfeat = jnp.maximum(
        jnp.dot(patches, wd_ref[...], preferred_element_type=jnp.float32)
        + bd_ref[...], 0.0)                                      # f32 [M, C_FEAT]

    # --- per-query attention pooling (block-diagonal over the batch) --------
    # rows of attn are (b, q)-major, so everything downstream is [B*Q, .]
    qf = jnp.dot(attn_ref[...], dfeat.astype(jnp.bfloat16),
                 preferred_element_type=jnp.float32)             # f32 [BQ, C_FEAT]
    qf_b = qf.astype(jnp.bfloat16)

    # --- query heads ---------------------------------------------------------
    logits = (jnp.dot(qf_b, wl_ref[...], preferred_element_type=jnp.float32)
              + bl_ref[...])                                     # [BQ, T]
    boxes = jax.nn.sigmoid(
        jnp.dot(qf_b, wb_ref[...], preferred_element_type=jnp.float32)
        + bb_ref[...])                                           # [BQ, 4] cxcywh in [0,1]

    # --- dinoPredict: per-query confidence = max_t sigmoid(logit) ------------
    score = jnp.max(jax.nn.sigmoid(logits), axis=-1, keepdims=True)   # [BQ, 1]

    # --- cxcywh (normalized) -> xyxy pixels: whole-tile math ----------------
    scaled = boxes * scale_ref[...]          # [cx*W, cy*H, w*W/2, h*H/2]
    ctr = scaled[:, 0:2]
    half = scaled[:, 2:4]

    # --- synthetic label vectors + tf-idf cosine matching -------------------
    lab = jnp.maximum(
        jnp.dot(logits.astype(jnp.bfloat16), wv_ref[...],
                preferred_element_type=jnp.float32) + bv_ref[...], 0.0)   # [BQ, V]
    num = jnp.dot(lab.astype(jnp.bfloat16), ct_ref[...],
                  preferred_element_type=jnp.float32)                     # [BQ, NCLS]
    inv_ln = jax.lax.rsqrt(jnp.sum(lab * lab, axis=-1, keepdims=True) + 1e-12)
    cos = num * inv_ln * icn_ref[...]                                     # [BQ, NCLS]

    # argmax + threshold -> class id (first-match semantics via masked iota)
    best_val = jnp.max(cos, axis=-1, keepdims=True)                       # [BQ, 1]
    idxf = jax.lax.broadcasted_iota(jnp.int32, cos.shape, 1).astype(jnp.float32)
    best_idx = jnp.min(jnp.where(cos >= best_val, idxf, float(NCLS)),
                       axis=-1, keepdims=True)
    cls = jnp.where(best_val > DINO_COS_SIM, best_idx, -1.0)

    # packed detection slab: [x0, y0, x1, y1, score, cls, best_cos, 0]
    det_ref[...] = jnp.concatenate(
        [ctr - half, ctr + half, score, cls, best_val, jnp.zeros_like(score)],
        axis=-1)


def fused_forward_call(patches_bf16, p):
    def full(shape):
        return pl.BlockSpec(shape, lambda i: (0, 0))

    return pl.pallas_call(
        _fused_kernel,
        out_shape=(jax.ShapeDtypeStruct((M_ROWS, C_FEAT), jnp.float32),
                   jax.ShapeDtypeStruct((BQ, 8), jnp.float32)),
        # Single step: everything fits trivially in VMEM (~100 KB).  Only
        # split the grid (e.g. over batch, "parallel") if sizes scale up
        # towards real resolutions / v7x dual-TC.
        grid=(1,),
        in_specs=[
            full((M_ROWS, K_PAD)),                    # patches (bf16)
            full((K_PAD, C_FEAT)), full((1, C_FEAT)),  # yolo conv W (bf16), b (f32)
            full((K_PAD, C_FEAT)), full((1, C_FEAT)),  # dino conv W (bf16), b (f32)
            full((BQ, M_ROWS)),                        # query attention (bf16)
            full((C_FEAT, T)), full((1, T)),           # logit head
            full((C_FEAT, 4)), full((1, 4)),           # box head
            full((1, 4)),                              # box scale row
            full((T, V)), full((1, V)),                # vocab projection
            full((V, NCLS)), full((1, NCLS)),          # tf-idf classes, inv norms
        ],
        out_specs=(full((M_ROWS, C_FEAT)), full((BQ, 8))),
    )(patches_bf16, p["conv_wy"], p["conv_by"], p["conv_wd"], p["conv_bd"],
      p["attn"], p["w_logit"], p["b_logit"], p["w_box"], p["b_box"],
      p["box_scale"], p["w_vocab"], p["b_vocab"], p["class_tfidf_t"],
      p["inv_class_norms"])


# ------------------------------- JAX glue ------------------------------------
def im2col_padded(x_nchw):
    """NCHW -> patch rows [B*Ho*Wo, K_PAD] (contraction dim zero-padded)."""
    xp = jnp.pad(x_nchw, ((0, 0), (0, 0), (PAD, PAD), (PAD, PAD)))
    cols = []
    for i in range(KH):
        for j in range(KW):
            cols.append(xp[:, :, i:i + STRIDE * HO:STRIDE, j:j + STRIDE * WO:STRIDE])
    patches = jnp.stack(cols, axis=2)                           # [B, C, kh*kw, Ho, Wo]
    patches = patches.transpose(0, 3, 4, 1, 2).reshape(B * HO * WO, K_RAW)
    return jnp.pad(patches, ((0, 0), (0, K_PAD - K_RAW)))


def init_params(key):
    ks = jax.random.split(key, 8)
    s = 0.1
    kpad = ((0, K_PAD - K_RAW), (0, 0))

    yolo_w = s * jax.random.normal(ks[0], (K_RAW, C_FEAT), jnp.float32)
    dino_w = s * jax.random.normal(ks[1], (K_RAW, C_FEAT), jnp.float32)

    # Fold ImageNet (x - mean) / std into the (linear) dino conv weights/bias.
    # im2col column ordering is (channel, kernel-pos), so repeat per channel.
    mean_col = jnp.repeat(jnp.asarray(IMAGENET_MEAN, jnp.float32), KH * KW)
    inv_std_col = jnp.repeat(1.0 / jnp.asarray(IMAGENET_STD, jnp.float32), KH * KW)
    dino_w_f = inv_std_col[:, None] * dino_w
    dino_b_f = -(mean_col * inv_std_col)[None, :] @ dino_w        # [1, C_FEAT]

    conv_wy = jnp.pad(yolo_w, kpad).astype(jnp.bfloat16)
    conv_by = jnp.zeros((1, C_FEAT), jnp.float32)
    conv_wd = jnp.pad(dino_w_f, kpad).astype(jnp.bfloat16)
    conv_bd = dino_b_f.astype(jnp.float32)

    # Per-query spatial attention pooling weights, block-diagonal over batch:
    # row (b*Q + q) attends only to image b's Ho*Wo positions.
    attn_q = jax.nn.softmax(
        2.0 * jax.random.normal(ks[2], (Q, S_SPAT), jnp.float32), axis=-1)
    attn = jnp.kron(jnp.eye(B, dtype=jnp.float32), attn_q).astype(jnp.bfloat16)

    w_logit = (s * jax.random.normal(ks[3], (C_FEAT, T), jnp.float32)).astype(jnp.bfloat16)
    b_logit = jnp.zeros((1, T), jnp.float32)
    w_box = (s * jax.random.normal(ks[4], (C_FEAT, 4), jnp.float32)).astype(jnp.bfloat16)
    b_box = jnp.zeros((1, 4), jnp.float32)
    box_scale = jnp.asarray([[float(W), float(H), 0.5 * W, 0.5 * H]], jnp.float32)

    w_vocab = (s * jax.random.normal(ks[5], (T, V), jnp.float32)).astype(jnp.bfloat16)
    b_vocab = jnp.zeros((1, V), jnp.float32)
    # synthetic tf-idf class matrix (non-negative like real tf-idf), pre-transposed;
    # inverse class norms precomputed on the host (review item 7).
    ct = jax.random.uniform(ks[6], (V, NCLS), jnp.float32)
    inv_class_norms = 1.0 / jnp.sqrt(jnp.sum(ct * ct, axis=0, keepdims=True))
    class_tfidf_t = ct.astype(jnp.bfloat16)

    return {
        "conv_wy": conv_wy, "conv_by": conv_by,
        "conv_wd": conv_wd, "conv_bd": conv_bd,
        "attn": attn,
        "w_logit": w_logit, "b_logit": b_logit,
        "w_box": w_box, "b_box": b_box, "box_scale": box_scale,
        "w_vocab": w_vocab, "b_vocab": b_vocab,
        "class_tfidf_t": class_tfidf_t, "inv_class_norms": inv_class_norms,
    }


@jax.jit
def forward(params, x_nchw):
    # shared im2col on the raw images (single pass), bf16 MXU operand
    patches = im2col_padded(x_nchw).astype(jnp.bfloat16)         # [M_ROWS, K_PAD]

    # ONE fused launch: conv surrogates + query pooling + heads + dinoPredict
    yolo_feat, det = fused_forward_call(patches, params)

    # NCHW relayout of the yolo features (tiny, one XLA op on ~16 KB)
    yolo_out = yolo_feat.reshape(B, HO, WO, C_FEAT).transpose(0, 3, 1, 2)

    preds = det[:, :6].reshape(B, Q, 6)       # (x0, y0, x1, y1, score, cls)
    valid = preds[..., 4] > DINO_BOX_THRESHOLD  # fixed-shape stand-in for the
    return preds, valid, yolo_out               # PyTorch variable-length list


if __name__ == "__main__":
    key = jax.random.PRNGKey(0)
    x = jax.random.uniform(key, (B, C_IN, H, W), dtype=jnp.float32)
    params = init_params(jax.random.PRNGKey(1))
    preds, valid, yolo_out = forward(params, x)
    jax.block_until_ready((preds, valid, yolo_out))
    assert preds.shape == (B, Q, 6)
    assert valid.shape == (B, Q)
    assert yolo_out.shape == (B, C_FEAT, H // STRIDE, W // STRIDE)
    assert bool(jnp.all(jnp.isfinite(preds)))
    print("KERNEL_OK")
</pallas_src>

<mosaic_0001>
module attributes {stable_mosaic.version = 11 : i64} {
  func.func @_fused_kernel(%arg0: i32, %arg1: memref<128x32xbf16, #tpu.memory_space<vmem>>, %arg2: memref<32x32xbf16, #tpu.memory_space<vmem>>, %arg3: memref<1x32xf32, #tpu.memory_space<vmem>>, %arg4: memref<32x32xbf16, #tpu.memory_space<vmem>>, %arg5: memref<1x32xf32, #tpu.memory_space<vmem>>, %arg6: memref<32x128xbf16, #tpu.memory_space<vmem>>, %arg7: memref<32x8xbf16, #tpu.memory_space<vmem>>, %arg8: memref<1x8xf32, #tpu.memory_space<vmem>>, %arg9: memref<32x4xbf16, #tpu.memory_space<vmem>>, %arg10: memref<1x4xf32, #tpu.memory_space<vmem>>, %arg11: memref<1x4xf32, #tpu.memory_space<vmem>>, %arg12: memref<8x64xbf16, #tpu.memory_space<vmem>>, %arg13: memref<1x64xf32, #tpu.memory_space<vmem>>, %arg14: memref<64x8xbf16, #tpu.memory_space<vmem>>, %arg15: memref<1x8xf32, #tpu.memory_space<vmem>>, %arg16: memref<128x32xf32, #tpu.memory_space<vmem>>, %arg17: memref<32x8xf32, #tpu.memory_space<vmem>>) attributes {dimension_semantics = [#tpu.dimension_semantics<arbitrary>], iteration_bounds = array<i64: 1>, scalar_prefetch = 0 : i64, scratch_operands = 0 : i64, tpu.core_type = #tpu.core_type<tc>, window_params = [{pipeline_mode = #tpu.pipeline_mode<synchronous>, transform_indices = @transform_0, window_bounds = array<i64: 128, 32>}, {pipeline_mode = #tpu.pipeline_mode<synchronous>, transform_indices = @transform_1, window_bounds = array<i64: 32, 32>}, {pipeline_mode = #tpu.pipeline_mode<synchronous>, transform_indices = @transform_2, window_bounds = array<i64: 1, 32>}, {pipeline_mode = #tpu.pipeline_mode<synchronous>, transform_indices = @transform_3, window_bounds = array<i64: 32, 32>}, {pipeline_mode = #tpu.pipeline_mode<synchronous>, transform_indices = @transform_4, window_bounds = array<i64: 1, 32>}, {pipeline_mode = #tpu.pipeline_mode<synchronous>, transform_indices = @transform_5, window_bounds = array<i64: 32, 128>}, {pipeline_mode = #tpu.pipeline_mode<synchronous>, transform_indices = @transform_6, window_bounds = array<i64: 32, 8>}, {pipeline_mode = #tpu.pipeline_mode<synchronous>, transform_indices = @transform_7, window_bounds = array<i64: 1, 8>}, {pipeline_mode = #tpu.pipeline_mode<synchronous>, transform_indices = @transform_8, window_bounds = array<i64: 32, 4>}, {pipeline_mode = #tpu.pipeline_mode<synchronous>, transform_indices = @transform_9, window_bounds = array<i64: 1, 4>}, {pipeline_mode = #tpu.pipeline_mode<synchronous>, transform_indices = @transform_10, window_bounds = array<i64: 1, 4>}, {pipeline_mode = #tpu.pipeline_mode<synchronous>, transform_indices = @transform_11, window_bounds = array<i64: 8, 64>}, {pipeline_mode = #tpu.pipeline_mode<synchronous>, transform_indices = @transform_12, window_bounds = array<i64: 1, 64>}, {pipeline_mode = #tpu.pipeline_mode<synchronous>, transform_indices = @transform_13, window_bounds = array<i64: 64, 8>}, {pipeline_mode = #tpu.pipeline_mode<synchronous>, transform_indices = @transform_14, window_bounds = array<i64: 1, 8>}, {pipeline_mode = #tpu.pipeline_mode<synchronous>, transform_indices = @transform_15, window_bounds = array<i64: 128, 32>}, {pipeline_mode = #tpu.pipeline_mode<synchronous>, transform_indices = @transform_16, window_bounds = array<i64: 32, 8>}]} {
    %c0 = arith.constant 0 : index
    %c0_0 = arith.constant 0 : index
    %0 = vector.load %arg1[%c0, %c0_0] : memref<128x32xbf16, #tpu.memory_space<vmem>>, vector<128x32xbf16>
    %c0_1 = arith.constant 0 : index
    %c0_2 = arith.constant 0 : index
    %1 = vector.load %arg2[%c0_1, %c0_2] : memref<32x32xbf16, #tpu.memory_space<vmem>>, vector<32x32xbf16>
    %cst = arith.constant dense<0.000000e+00> : vector<128x32xf32>
    %2 = tpu.matmul %0, %1, %cst {dimension_numbers = #tpu.dot_dimension_numbers<[1], [0], [0], [1], [0, 0, 1, 1], [], []>} : vector<128x32xbf16>, vector<32x32xbf16>, vector<128x32xf32> -> vector<128x32xf32>
    %c0_3 = arith.constant 0 : index
    %c0_4 = arith.constant 0 : index
    %3 = vector.load %arg3[%c0_3, %c0_4] : memref<1x32xf32, #tpu.memory_space<vmem>>, vector<1x32xf32>
    %4 = vector.broadcast %3 : vector<1x32xf32> to vector<128x32xf32>
    %5 = arith.addf %2, %4 : vector<128x32xf32>
    %cst_5 = arith.constant 0.000000e+00 : f32
    %6 = vector.broadcast %cst_5 : f32 to vector<128x32xf32>
    %7 = arith.maximumf %5, %6 : vector<128x32xf32>
    %c0_6 = arith.constant 0 : index
    %c0_7 = arith.constant 0 : index
    %8 = vector.load %arg16[%c0_6, %c0_7] : memref<128x32xf32, #tpu.memory_space<vmem>>, vector<128x32xf32>
    tpu.vector_store %arg16[%c0_6, %c0_7], %7 {strides = array<i32>} : memref<128x32xf32, #tpu.memory_space<vmem>>, vector<128x32xf32>,
    %c0_8 = arith.constant 0 : index
    %c0_9 = arith.constant 0 : index
    %9 = vector.load %arg4[%c0_8, %c0_9] : memref<32x32xbf16, #tpu.memory_space<vmem>>, vector<32x32xbf16>
    %cst_10 = arith.constant dense<0.000000e+00> : vector<128x32xf32>
    %10 = tpu.matmul %0, %9, %cst_10 {dimension_numbers = #tpu.dot_dimension_numbers<[1], [0], [0], [1], [0, 0, 1, 1], [], []>} : vector<128x32xbf16>, vector<32x32xbf16>, vector<128x32xf32> -> vector<128x32xf32>
    %c0_11 = arith.constant 0 : index
    %c0_12 = arith.constant 0 : index
    %11 = vector.load %arg5[%c0_11, %c0_12] : memref<1x32xf32, #tpu.memory_space<vmem>>, vector<1x32xf32>
    %12 = vector.broadcast %11 : vector<1x32xf32> to vector<128x32xf32>
    %13 = arith.addf %10, %12 : vector<128x32xf32>
    %cst_13 = arith.constant 0.000000e+00 : f32
    %14 = vector.broadcast %cst_13 : f32 to vector<128x32xf32>
    %15 = arith.maximumf %13, %14 : vector<128x32xf32>
    %c0_14 = arith.constant 0 : index
    %c0_15 = arith.constant 0 : index
    %16 = vector.load %arg6[%c0_14, %c0_15] : memref<32x128xbf16, #tpu.memory_space<vmem>>, vector<32x128xbf16>
    %17 = arith.truncf %15 : vector<128x32xf32> to vector<128x32xbf16>
    %cst_16 = arith.constant dense<0.000000e+00> : vector<32x32xf32>
    %18 = tpu.matmul %16, %17, %cst_16 {dimension_numbers = #tpu.dot_dimension_numbers<[1], [0], [0], [1], [0, 0, 1, 1], [], []>} : vector<32x128xbf16>, vector<128x32xbf16>, vector<32x32xf32> -> vector<32x32xf32>
    %19 = arith.truncf %18 : vector<32x32xf32> to vector<32x32xbf16>
    %c0_17 = arith.constant 0 : index
    %c0_18 = arith.constant 0 : index
    %20 = vector.load %arg7[%c0_17, %c0_18] : memref<32x8xbf16, #tpu.memory_space<vmem>>, vector<32x8xbf16>
    %cst_19 = arith.constant dense<0.000000e+00> : vector<32x8xf32>
    %21 = tpu.matmul %19, %20, %cst_19 {dimension_numbers = #tpu.dot_dimension_numbers<[1], [0], [0], [1], [0, 0, 1, 1], [], []>} : vector<32x32xbf16>, vector<32x8xbf16>, vector<32x8xf32> -> vector<32x8xf32>
    %c0_20 = arith.constant 0 : index
    %c0_21 = arith.constant 0 : index
    %22 = vector.load %arg8[%c0_20, %c0_21] : memref<1x8xf32, #tpu.memory_space<vmem>>, vector<1x8xf32>
    %23 = vector.broadcast %22 : vector<1x8xf32> to vector<32x8xf32>
    %24 = arith.addf %21, %23 : vector<32x8xf32>
    %c0_22 = arith.constant 0 : index
    %c0_23 = arith.constant 0 : index
    %25 = vector.load %arg9[%c0_22, %c0_23] : memref<32x4xbf16, #tpu.memory_space<vmem>>, vector<32x4xbf16>
    %cst_24 = arith.constant dense<0.000000e+00> : vector<32x4xf32>
    %26 = tpu.matmul %19, %25, %cst_24 {dimension_numbers = #tpu.dot_dimension_numbers<[1], [0], [0], [1], [0, 0, 1, 1], [], []>} : vector<32x32xbf16>, vector<32x4xbf16>, vector<32x4xf32> -> vector<32x4xf32>
    %c0_25 = arith.constant 0 : index
    %c0_26 = arith.constant 0 : index
    %27 = vector.load %arg10[%c0_25, %c0_26] : memref<1x4xf32, #tpu.memory_space<vmem>>, vector<1x4xf32>
    %28 = vector.broadcast %27 : vector<1x4xf32> to vector<32x4xf32>
    %29 = arith.addf %26, %28 : vector<32x4xf32>
    %30 = arith.negf %29 : vector<32x4xf32>
    %31 = math.exp %30 : vector<32x4xf32>
    %cst_27 = arith.constant 1.000000e+00 : f32
    %32 = vector.broadcast %cst_27 : f32 to vector<32x4xf32>
    %33 = arith.addf %32, %31 : vector<32x4xf32>
    %34 = arith.divf %32, %33 : vector<32x4xf32>
    %35 = arith.negf %24 : vector<32x8xf32>
    %36 = math.exp %35 : vector<32x8xf32>
    %cst_28 = arith.constant 1.000000e+00 : f32
    %37 = vector.broadcast %cst_28 : f32 to vector<32x8xf32>
    %38 = arith.addf %37, %36 : vector<32x8xf32>
    %39 = arith.divf %37, %38 : vector<32x8xf32>
    %cst_29 = arith.constant dense<0xFF800000> : vector<32xf32>
    %40 = vector.multi_reduction <maximumf>, %39, %cst_29 [1] : vector<32x8xf32> to vector<32xf32>
    %41 = vector.shape_cast %40 : vector<32xf32> to vector<32x1xf32>
    %c0_30 = arith.constant 0 : index
    %c0_31 = arith.constant 0 : index
    %42 = vector.load %arg11[%c0_30, %c0_31] : memref<1x4xf32, #tpu.memory_space<vmem>>, vector<1x4xf32>
    %43 = vector.broadcast %42 : vector<1x4xf32> to vector<32x4xf32>
    %44 = arith.mulf %34, %43 : vector<32x4xf32>
    %45 = vector.extract_strided_slice %44 {offsets = [0, 0], sizes = [32, 2], strides = [1, 1]} : vector<32x4xf32> to vector<32x2xf32>
    %46 = vector.extract_strided_slice %44 {offsets = [0, 2], sizes = [32, 2], strides = [1, 1]} : vector<32x4xf32> to vector<32x2xf32>
    %47 = arith.truncf %24 : vector<32x8xf32> to vector<32x8xbf16>
    %c0_32 = arith.constant 0 : index
    %c0_33 = arith.constant 0 : index
    %48 = vector.load %arg12[%c0_32, %c0_33] : memref<8x64xbf16, #tpu.memory_space<vmem>>, vector<8x64xbf16>
    %cst_34 = arith.constant dense<0.000000e+00> : vector<32x64xf32>
    %49 = tpu.matmul %47, %48, %cst_34 {dimension_numbers = #tpu.dot_dimension_numbers<[1], [0], [0], [1], [0, 0, 1, 1], [], []>} : vector<32x8xbf16>, vector<8x64xbf16>, vector<32x64xf32> -> vector<32x64xf32>
    %c0_35 = arith.constant 0 : index
    %c0_36 = arith.constant 0 : index
    %50 = vector.load %arg13[%c0_35, %c0_36] : memref<1x64xf32, #tpu.memory_space<vmem>>, vector<1x64xf32>
    %51 = vector.broadcast %50 : vector<1x64xf32> to vector<32x64xf32>
    %52 = arith.addf %49, %51 : vector<32x64xf32>
    %cst_37 = arith.constant 0.000000e+00 : f32
    %53 = vector.broadcast %cst_37 : f32 to vector<32x64xf32>
    %54 = arith.maximumf %52, %53 : vector<32x64xf32>
    %55 = arith.truncf %54 : vector<32x64xf32> to vector<32x64xbf16>
    %c0_38 = arith.constant 0 : index
    %c0_39 = arith.constant 0 : index
    %56 = vector.load %arg14[%c0_38, %c0_39] : memref<64x8xbf16, #tpu.memory_space<vmem>>, vector<64x8xbf16>
    %cst_40 = arith.constant dense<0.000000e+00> : vector<32x8xf32>
    %57 = tpu.matmul %55, %56, %cst_40 {dimension_numbers = #tpu.dot_dimension_numbers<[1], [0], [0], [1], [0, 0, 1, 1], [], []>} : vector<32x64xbf16>, vector<64x8xbf16>, vector<32x8xf32> -> vector<32x8xf32>
    %58 = arith.mulf %54, %54 : vector<32x64xf32>
    %cst_41 = arith.constant dense<0.000000e+00> : vector<32xf32>
    %59 = vector.multi_reduction <add>, %58, %cst_41 [1] : vector<32x64xf32> to vector<32xf32>
    %60 = vector.shape_cast %59 : vector<32xf32> to vector<32x1xf32>
    %cst_42 = arith.constant 9.99999996E-13 : f32
    %61 = vector.broadcast %cst_42 : f32 to vector<32x1xf32>
    %62 = arith.addf %60, %61 : vector<32x1xf32>
    %63 = math.rsqrt %62 : vector<32x1xf32>
    %64 = vector.broadcast %63 : vector<32x1xf32> to vector<32x8xf32>
    %65 = arith.mulf %57, %64 : vector<32x8xf32>
    %c0_43 = arith.constant 0 : index
    %c0_44 = arith.constant 0 : index
    %66 = vector.load %arg15[%c0_43, %c0_44] : memref<1x8xf32, #tpu.memory_space<vmem>>, vector<1x8xf32>
    %67 = vector.broadcast %66 : vector<1x8xf32> to vector<32x8xf32>
    %68 = arith.mulf %65, %67 : vector<32x8xf32>
    %cst_45 = arith.constant dense<0xFF800000> : vector<32xf32>
    %69 = vector.multi_reduction <maximumf>, %68, %cst_45 [1] : vector<32x8xf32> to vector<32xf32>
    %70 = vector.shape_cast %69 : vector<32xf32> to vector<32x1xf32>
    %71 = tpu.iota {dimensions = array<i32: 1>} : vector<32x8xi32>
    %72 = arith.sitofp %71 : vector<32x8xi32> to vector<32x8xf32>
    %73 = vector.broadcast %70 : vector<32x1xf32> to vector<32x8xf32>
    %74 = arith.cmpf oge, %68, %73 : vector<32x8xf32>
    %cst_46 = arith.constant 8.000000e+00 : f32
    %75 = vector.broadcast %cst_46 : f32 to vector<32x8xf32>
    %76 = arith.select %74, %72, %75 : vector<32x8xi1>, vector<32x8xf32>
    %cst_47 = arith.constant dense<0x7F800000> : vector<32xf32>
    %77 = vector.multi_reduction <minimumf>, %76, %cst_47 [1] : vector<32x8xf32> to vector<32xf32>
    %78 = vector.shape_cast %77 : vector<32xf32> to vector<32x1xf32>
    %cst_48 = arith.constant 1.000000e-01 : f32
    %79 = vector.broadcast %cst_48 : f32 to vector<32x1xf32>
    %80 = arith.cmpf ogt, %70, %79 : vector<32x1xf32>
    %cst_49 = arith.constant -1.000000e+00 : f32
    %81 = vector.broadcast %cst_49 : f32 to vector<32x1xf32>
    %82 = arith.select %80, %78, %81 : vector<32x1xi1>, vector<32x1xf32>
    %83 = arith.subf %45, %46 : vector<32x2xf32>
    %84 = arith.addf %45, %46 : vector<32x2xf32>
    %cst_50 = arith.constant 0.000000e+00 : f32
    %85 = vector.broadcast %cst_50 : f32 to vector<32x1xf32>
    %86 = tpu.concatenate %83, %84, %41, %82, %70, %85 in 1 : vector<32x2xf32>, vector<32x2xf32>, vector<32x1xf32>, vector<32x1xf32>, vector<32x1xf32>, vector<32x1xf32> -> vector<32x8xf32>
    %c0_51 = arith.constant 0 : index
    %c0_52 = arith.constant 0 : index
    %87 = vector.load %arg17[%c0_51, %c0_52] : memref<32x8xf32, #tpu.memory_space<vmem>>, vector<32x8xf32>
    tpu.vector_store %arg17[%c0_51, %c0_52], %86 {strides = array<i32>} : memref<32x8xf32, #tpu.memory_space<vmem>>, vector<32x8xf32>,
    return
  }
  func.func @transform_0(%arg0: i32) -> (i32, i32) {
    %c0_i32 = arith.constant 0 : i32
    %c0_i32_0 = arith.constant 0 : i32
    %c0_i32_1 = arith.constant 0 : i32
    return %c0_i32, %c0_i32_0 : i32, i32
  }
  func.func @transform_1(%arg0: i32) -> (i32, i32) {
    %c0_i32 = arith.constant 0 : i32
    %c0_i32_0 = arith.constant 0 : i32
    %c0_i32_1 = arith.constant 0 : i32
    return %c0_i32, %c0_i32_0 : i32, i32
  }
  func.func @transform_2(%arg0: i32) -> (i32, i32) {
    %c0_i32 = arith.constant 0 : i32
    %c0_i32_0 = arith.constant 0 : i32
    %c0_i32_1 = arith.constant 0 : i32
    return %c0_i32, %c0_i32_0 : i32, i32
  }
  func.func @transform_3(%arg0: i32) -> (i32, i32) {
    %c0_i32 = arith.constant 0 : i32
    %c0_i32_0 = arith.constant 0 : i32
    %c0_i32_1 = arith.constant 0 : i32
    return %c0_i32, %c0_i32_0 : i32, i32
  }
  func.func @transform_4(%arg0: i32) -> (i32, i32) {
    %c0_i32 = arith.constant 0 : i32
    %c0_i32_0 = arith.constant 0 : i32
    %c0_i32_1 = arith.constant 0 : i32
    return %c0_i32, %c0_i32_0 : i32, i32
  }
  func.func @transform_5(%arg0: i32) -> (i32, i32) {
    %c0_i32 = arith.constant 0 : i32
    %c0_i32_0 = arith.constant 0 : i32
    %c0_i32_1 = arith.constant 0 : i32
    return %c0_i32, %c0_i32_0 : i32, i32
  }
  func.func @transform_6(%arg0: i32) -> (i32, i32) {
    %c0_i32 = arith.constant 0 : i32
    %c0_i32_0 = arith.constant 0 : i32
    %c0_i32_1 = arith.constant 0 : i32
    return %c0_i32, %c0_i32_0 : i32, i32
  }
  func.func @transform_7(%arg0: i32) -> (i32, i32) {
    %c0_i32 = arith.constant 0 : i32
    %c0_i32_0 = arith.constant 0 : i32
    %c0_i32_1 = arith.constant 0 : i32
    return %c0_i32, %c0_i32_0 : i32, i32
  }
  func.func @transform_8(%arg0: i32) -> (i32, i32) {
    %c0_i32 = arith.constant 0 : i32
    %c0_i32_0 = arith.constant 0 : i32
    %c0_i32_1 = arith.constant 0 : i32
    return %c0_i32, %c0_i32_0 : i32, i32
  }
  func.func @transform_9(%arg0: i32) -> (i32, i32) {
    %c0_i32 = arith.constant 0 : i32
    %c0_i32_0 = arith.constant 0 : i32
    %c0_i32_1 = arith.constant 0 : i32
    return %c0_i32, %c0_i32_0 : i32, i32
  }
  func.func @transform_10(%arg0: i32) -> (i32, i32) {
    %c0_i32 = arith.constant 0 : i32
    %c0_i32_0 = arith.constant 0 : i32
    %c0_i32_1 = arith.constant 0 : i32
    return %c0_i32, %c0_i32_0 : i32, i32
  }
  func.func @transform_11(%arg0: i32) -> (i32, i32) {
    %c0_i32 = arith.constant 0 : i32
    %c0_i32_0 = arith.constant 0 : i32
    %c0_i32_1 = arith.constant 0 : i32
    return %c0_i32, %c0_i32_0 : i32, i32
  }
  func.func @transform_12(%arg0: i32) -> (i32, i32) {
    %c0_i32 = arith.constant 0 : i32
    %c0_i32_0 = arith.constant 0 : i32
    %c0_i32_1 = arith.constant 0 : i32
    return %c0_i32, %c0_i32_0 : i32, i32
  }
  func.func @transform_13(%arg0: i32) -> (i32, i32) {
    %c0_i32 = arith.constant 0 : i32
    %c0_i32_0 = arith.constant 0 : i32
    %c0_i32_1 = arith.constant 0 : i32
    return %c0_i32, %c0_i32_0 : i32, i32
  }
  func.func @transform_14(%arg0: i32) -> (i32, i32) {
    %c0_i32 = arith.constant 0 : i32
    %c0_i32_0 = arith.constant 0 : i32
    %c0_i32_1 = arith.constant 0 : i32
    return %c0_i32, %c0_i32_0 : i32, i32
  }
  func.func @transform_15(%arg0: i32) -> (i32, i32) {
    %c0_i32 = arith.constant 0 : i32
    %c0_i32_0 = arith.constant 0 : i32
    %c0_i32_1 = arith.constant 0 : i32
    return %c0_i32, %c0_i32_0 : i32, i32
  }
  func.func @transform_16(%arg0: i32) -> (i32, i32) {
    %c0_i32 = arith.constant 0 : i32
    %c0_i32_0 = arith.constant 0 : i32
    %c0_i32_1 = arith.constant 0 : i32
    return %c0_i32, %c0_i32_0 : i32, i32
  }
}

</mosaic_0001>

<llo_original>
// kernel: forward.1
$region0: #{forward.1}
  #allocation0 [shape = 'u32[]', space=smem, size = 0x4, offset = 0x4, fixed_abs, tag = 'smem constant byte address 0x4 - core index']
  #allocation1 [shape = 'u32[144,128]{1,0:T(1,128)}', space=vmem, size = 0x12000, scoped, tag = 'internal scratch']
  %s0 = inlined_call_operand.vmem [shape: bf16[128,32], index: 0, kind: input, shape index: {}]
  %s1 = inlined_call_operand.vmem [shape: bf16[32,32], index: 1, kind: input, shape index: {}]
  %s2 = inlined_call_operand.vmem [shape: f32[1,32], index: 2, kind: input, shape index: {}]
  %s3 = inlined_call_operand.vmem [shape: bf16[32,32], index: 3, kind: input, shape index: {}]
  %s4 = inlined_call_operand.vmem [shape: f32[1,32], index: 4, kind: input, shape index: {}]
  %s5 = inlined_call_operand.vmem [shape: bf16[32,128], index: 5, kind: input, shape index: {}]
  %s6 = inlined_call_operand.vmem [shape: bf16[32,8], index: 6, kind: input, shape index: {}]
  %s7 = inlined_call_operand.vmem [shape: f32[1,8], index: 7, kind: input, shape index: {}]
  %s8 = inlined_call_operand.vmem [shape: bf16[32,4], index: 8, kind: input, shape index: {}]
  %s9 = inlined_call_operand.vmem [shape: f32[1,4], index: 9, kind: input, shape index: {}]
  %s10 = inlined_call_operand.vmem [shape: f32[1,4], index: 10, kind: input, shape index: {}]
  %s11 = inlined_call_operand.vmem [shape: bf16[8,64], index: 11, kind: input, shape index: {}]
  %s12 = inlined_call_operand.vmem [shape: f32[1,64], index: 12, kind: input, shape index: {}]
  %s13 = inlined_call_operand.vmem [shape: bf16[64,8], index: 13, kind: input, shape index: {}]
  %s14 = inlined_call_operand.vmem [shape: f32[1,8], index: 14, kind: input, shape index: {}]
  %s15 = inlined_call_operand.hbm [shape: f32[128,32], index: 15, kind: output, shape index: {0}]
  %s16 = inlined_call_operand.vmem [shape: f32[32,8], index: 16, kind: output, shape index: {1}]
  %17 = xla_tuple %s15, %s16
  %s18 = sld [smem:[#allocation0]]
  $region78: #{forward.1} parent=0
    _
  %s20 = ssub.s32 1, %s18
  %s21 = scalar_select 0, %s20, %s18
  $region1: #{forward.1} parent=0
    #allocation2 [shape = 'u8[65536]{0}', space=vmem, size = 0x10000, scoped, tag = 'output window, operand 0, single buffered']
    #allocation3 [shape = 's32[1]{0}', space=sflag, size = 0x4, scoped, tag = 'scoped memory for forward.1']
    %22 = vsyncpa [#allocation3], 0
    // Predicated region
    $region2: #{forward.1} parent=1 // pred_check
      _
    $region3: #{forward.1} parent=1 // pred_check_branch
      %24 = sbr.rel (0) target = $region5
    $region4: #{forward.1} parent=1 // pred_region
      _
    $region5: #{forward.1} parent=1 // pred_fallthru
      _
    // Predicated region
    $region6: #{forward.1} parent=1 // pred_check
      _
    $region7: #{forward.1} parent=1 // pred_check_branch
      %26 = sbr.rel (0) target = $region9
    $region8: #{forward.1} parent=1 // pred_region
      _
    $region9: #{forward.1} parent=1 // pred_fallthru
      _
    // Predicated region
    $region10: #{forward.1} parent=1 // pred_check
      _
    $region11: #{forward.1} parent=1 // pred_check_branch
      %28 = sbr.rel (0) target = $region13
    $region12: #{forward.1} parent=1 // pred_region
      _
    $region13: #{forward.1} parent=1 // pred_fallthru
      _
    // Predicated region
    $region14: #{forward.1} parent=1 // pred_check
      _
    $region15: #{forward.1} parent=1 // pred_check_branch
      %30 = sbr.rel (0) target = $region17
    $region16: #{forward.1} parent=1 // pred_region
      _
    $region17: #{forward.1} parent=1 // pred_fallthru
      _
    // Predicated region
    $region18: #{forward.1} parent=1 // pred_check
      _
    $region19: #{forward.1} parent=1 // pred_check_branch
      %32 = sbr.rel (0) target = $region21
    $region20: #{forward.1} parent=1 // pred_region
      _
    $region21: #{forward.1} parent=1 // pred_fallthru
      _
    // Predicated region
    $region22: #{forward.1} parent=1 // pred_check
      _
    $region23: #{forward.1} parent=1 // pred_check_branch
      %34 = sbr.rel (0) target = $region25
    $region24: #{forward.1} parent=1 // pred_region
      _
    $region25: #{forward.1} parent=1 // pred_fallthru
      _
    // Predicated region
    $region26: #{forward.1} parent=1 // pred_check
      _
    $region27: #{forward.1} parent=1 // pred_check_branch
      %36 = sbr.rel (0) target = $region29
    $region28: #{forward.1} parent=1 // pred_region
      _
    $region29: #{forward.1} parent=1 // pred_fallthru
      _
    // Predicated region
    $region30: #{forward.1} parent=1 // pred_check
      _
    $region31: #{forward.1} parent=1 // pred_check_branch
      %38 = sbr.rel (0) target = $region33
    $region32: #{forward.1} parent=1 // pred_region
      _
    $region33: #{forward.1} parent=1 // pred_fallthru
      _
    // Predicated region
    $region34: #{forward.1} parent=1 // pred_check
      _
    $region35: #{forward.1} parent=1 // pred_check_branch
      %40 = sbr.rel (0) target = $region37
    $region36: #{forward.1} parent=1 // pred_region
      _
    $region37: #{forward.1} parent=1 // pred_fallthru
      _
    // Predicated region
    $region38: #{forward.1} parent=1 // pred_check
      _
    $region39: #{forward.1} parent=1 // pred_check_branch
      %42 = sbr.rel (0) target = $region41
    $region40: #{forward.1} parent=1 // pred_region
      _
    $region41: #{forward.1} parent=1 // pred_fallthru
      _
    // Predicated region
    $region42: #{forward.1} parent=1 // pred_check
      _
    $region43: #{forward.1} parent=1 // pred_check_branch
      %44 = sbr.rel (0) target = $region45
    $region44: #{forward.1} parent=1 // pred_region
      _
    $region45: #{forward.1} parent=1 // pred_fallthru
      _
    // Predicated region
    $region46: #{forward.1} parent=1 // pred_check
      _
    $region47: #{forward.1} parent=1 // pred_check_branch
      %46 = sbr.rel (0) target = $region49
    $region48: #{forward.1} parent=1 // pred_region
      _
    $region49: #{forward.1} parent=1 // pred_fallthru
      _
    // Predicated region
    $region50: #{forward.1} parent=1 // pred_check
      _
    $region51: #{forward.1} parent=1 // pred_check_branch
      %48 = sbr.rel (0) target = $region53
    $region52: #{forward.1} parent=1 // pred_region
      _
    $region53: #{forward.1} parent=1 // pred_fallthru
      _
    // Predicated region
    $region54: #{forward.1} parent=1 // pred_check
      _
    $region55: #{forward.1} parent=1 // pred_check_branch
      %50 = sbr.rel (0) target = $region57
    $region56: #{forward.1} parent=1 // pred_region
      _
    $region57: #{forward.1} parent=1 // pred_fallthru
      _
    // Predicated region
    $region58: #{forward.1} parent=1 // pred_check
      _
    $region59: #{forward.1} parent=1 // pred_check_branch
      %52 = sbr.rel (0) target = $region61
    $region60: #{forward.1} parent=1 // pred_region
      _
    $region61: #{forward.1} parent=1 // pred_fallthru
      _
    %v54 = vld [vmem:[%s0] sm:$0xf]
    %v55 = vld [vmem:[%s0 + $0x4] sm:$0xf]
    %v56 = vld [vmem:[%s0 + $0x8] sm:$0xf]
    %v57 = vld [vmem:[%s0 + $0xc] sm:$0xf]
    %v58 = vld [vmem:[%s0 + $0x10] sm:$0xf]
    %v59 = vld [vmem:[%s0 + $0x14] sm:$0xf]
    %v60 = vld [vmem:[%s0 + $0x18] sm:$0xf]
    %v61 = vld [vmem:[%s0 + $0x1c] sm:$0xf]
    %v62 = vld [vmem:[%s0 + $0x20] sm:$0xf]
    %v63 = vld [vmem:[%s0 + $0x24] sm:$0xf]
    %v64 = vld [vmem:[%s0 + $0x28] sm:$0xf]
    %v65 = vld [vmem:[%s0 + $0x2c] sm:$0xf]
    %v66 = vld [vmem:[%s0 + $0x30] sm:$0xf]
    %v67 = vld [vmem:[%s0 + $0x34] sm:$0xf]
    %v68 = vld [vmem:[%s0 + $0x38] sm:$0xf]
    %v69 = vld [vmem:[%s0 + $0x3c] sm:$0xf]
    %v70 = vld [vmem:[%s1] sm:$0xf]
    %v71 = vld [vmem:[%s1 + $0x4] sm:$0xf]
    %v72 = vld [vmem:[%s1 + $0x8] sm:$0xf]
    %v73 = vld [vmem:[%s1 + $0xc] sm:$0xf]
    %v74 = vld [vmem:[%s2] sm:$0x1]
    %v76 = vlaneseq
    %v77 = vshrl.u32 %v76, 7
    %v78 = vsub.s32 0, %v77
    %v79 = vrot.slane %v74, %v78
    %v97 = vunpack.c.l.b16 %v54
    %v98 = vunpack.c.l.b16 %v55
    %v99 = vunpack.c.l.b16 %v56
    %v100 = vunpack.c.l.b16 %v57
    %v101 = vunpack.c.l.b16 %v58
    %v102 = vunpack.c.l.b16 %v59
    %v103 = vunpack.c.l.b16 %v60
    %v104 = vunpack.c.l.b16 %v61
    %v105 = vunpack.c.l.b16 %v62
    %v106 = vunpack.c.l.b16 %v63
    %v107 = vunpack.c.l.b16 %v64
    %v108 = vunpack.c.l.b16 %v65
    %v109 = vunpack.c.l.b16 %v66
    %v110 = vunpack.c.l.b16 %v67
    %v111 = vunpack.c.l.b16 %v68
    %v112 = vunpack.c.l.b16 %v69
    %v113 = vpack.c.b16 %v98, %v97
    %v114 = vpack.c.b16 %v100, %v99
    %v115 = vpack.c.b16 %v102, %v101
    %v116 = vpack.c.b16 %v104, %v103
    %v117 = vpack.c.b16 %v106, %v105
    %v118 = vpack.c.b16 %v108, %v107
    %v119 = vpack.c.b16 %v110, %v109
    %v120 = vpack.c.b16 %v112, %v111
    %v125 = vunpack.c.l.b16 %v70
    %v126 = vunpack.c.l.b16 %v71
    %v127 = vunpack.c.l.b16 %v72
    %v128 = vunpack.c.l.b16 %v73
    %v129 = vpack.c.b16 %v126, %v125
    %v130 = vpack.c.b16 %v128, %v127
    %vm133 = vcmask 261120
    %v135 = vsel %vm133, %v113, 0
    %v138 = vsel %vm133, %v114, 0
    %v141 = vsel %vm133, %v115, 0
    %v144 = vsel %vm133, %v116, 0
    %v147 = vsel %vm133, %v117, 0
    %v150 = vsel %vm133, %v118, 0
    %v153 = vsel %vm133, %v119, 0
    %v156 = vsel %vm133, %v120, 0
    %158 = vmatprep.subr.bf16.mxu0 0
    %159 = vmatpush1.bf16.msra.mxu0 0
    %160 = vmatprep.subr.bf16.mxu0 0
    %161 = vmatpush1.bf16.msra.mxu0 0
    %162 = vmatprep.subr.bf16.mxu0 0
    %163 = vmatpush1.bf16.msra.mxu0 0
    %164 = vmatprep.subr.bf16.mxu0 0
    %165 = vmatpush1.bf16.msra.mxu0 0
    %166 = vmatprep.subr.bf16.mxu0 0
    %167 = vmatpush1.bf16.msra.mxu0 0
    %168 = vmatprep.subr.bf16.mxu0 0
    %169 = vmatpush1.bf16.msra.mxu0 0
    %170 = vmatprep.subr.bf16.mxu0 0
    %171 = vmatpush1.bf16.msra.mxu0 %v130
    %172 = vmatprep.subr.bf16.mxu0 0
    %173 = vmatpush1.bf16.msra.mxu0 %v129
    %174 = vmatprep.subr.bf16.mxu0 0
    %175 = vmatpush2.bf16.msra.mxu0 0
    %176 = vmatprep.subr.bf16.mxu0 0
    %177 = vmatpush2.bf16.msra.mxu0 0
    %178 = vmatprep.subr.bf16.mxu0 0
    %179 = vmatpush2.bf16.msra.mxu0 0
    %180 = vmatprep.subr.bf16.mxu0 0
    %181 = vmatpush2.bf16.msra.mxu0 0
    %182 = vmatprep.subr.bf16.mxu0 0
    %183 = vmatpush2.bf16.msra.mxu0 0
    %184 = vmatprep.subr.bf16.mxu0 0
    %185 = vmatpush2.bf16.msra.mxu0 0
    %186 = vmatprep.subr.bf16.mxu0 0
    %187 = vmatpush2.bf16.msra.mxu0 0
    %188 = vmatprep.subr.bf16.mxu0 0
    %189 = vmatpush2.bf16.msra.mxu0 0
    %190 = vmatprep.mubr.bf16.mxu0 0
    %191 = vmatmul.mubr.bf16.gmra.mxu0 %v135
    %v192 = vpop.f32.mrf.mxu0
    %v193 = vadd.f32 %v79, %v192
    %v194 = vpop.f32.mrf.mxu0
    %v195 = vpop.f32.mrf.mxu0
    %v196 = vadd.f32 %v79, %v195
    %v197 = vpop.f32.mrf.mxu0
    %198 = vmatprep.mubr.bf16.mxu0 0
    %199 = vmatmul.mubr.bf16.gmra.mxu0 %v138
    %v200 = vpop.f32.mrf.mxu0
    %v201 = vadd.f32 %v79, %v200
    %v202 = vpop.f32.mrf.mxu0
    %v203 = vpop.f32.mrf.mxu0
    %v204 = vadd.f32 %v79, %v203
    %v205 = vpop.f32.mrf.mxu0
    %206 = vmatprep.mubr.bf16.mxu0 0
    %207 = vmatmul.mubr.bf16.gmra.mxu0 %v141
    %v208 = vpop.f32.mrf.mxu0
    %v209 = vadd.f32 %v79, %v208
    %v210 = vpop.f32.mrf.mxu0
    %v211 = vpop.f32.mrf.mxu0
    %v212 = vadd.f32 %v79, %v211
    %v213 = vpop.f32.mrf.mxu0
    %214 = vmatprep.mubr.bf16.mxu0 0
    %215 = vmatmul.mubr.bf16.gmra.mxu0 %v144
    %v216 = vpop.f32.mrf.mxu0
    %v217 = vadd.f32 %v79, %v216
    %v218 = vpop.f32.mrf.mxu0
    %v219 = vpop.f32.mrf.mxu0
    %v220 = vadd.f32 %v79, %v219
    %v221 = vpop.f32.mrf.mxu0
    %222 = vmatprep.mubr.bf16.mxu0 0
    %223 = vmatmul.mubr.bf16.gmra.mxu0 %v147
    %v224 = vpop.f32.mrf.mxu0
    %v225 = vadd.f32 %v79, %v224
    %v226 = vpop.f32.mrf.mxu0
    %v227 = vpop.f32.mrf.mxu0
    %v228 = vadd.f32 %v79, %v227
    %v229 = vpop.f32.mrf.mxu0
    %230 = vmatprep.mubr.bf16.mxu0 0
    %231 = vmatmul.mubr.bf16.gmra.mxu0 %v150
    %v232 = vpop.f32.mrf.mxu0
    %v233 = vadd.f32 %v79, %v232
    %v234 = vpop.f32.mrf.mxu0
    %v235 = vpop.f32.mrf.mxu0
    %v236 = vadd.f32 %v79, %v235
    %v237 = vpop.f32.mrf.mxu0
    %238 = vmatprep.mubr.bf16.mxu0 0
    %239 = vmatmul.mubr.bf16.gmra.mxu0 %v153
    %v240 = vpop.f32.mrf.mxu0
    %v241 = vadd.f32 %v79, %v240
    %v242 = vpop.f32.mrf.mxu0
    %v243 = vpop.f32.mrf.mxu0
    %v244 = vadd.f32 %v79, %v243
    %v245 = vpop.f32.mrf.mxu0
    %246 = vmatprep.mubr.bf16.mxu0 0
    %247 = vmatmul.mubr.bf16.gmra.mxu0 %v156
    %v248 = vpop.f32.mrf.mxu0
    %v249 = vadd.f32 %v79, %v248
    %v250 = vpop.f32.mrf.mxu0
    %v251 = vpop.f32.mrf.mxu0
    %v252 = vadd.f32 %v79, %v251
    %v253 = vpop.f32.mrf.mxu0
    %254 = vdwg.mxu0
    %v255 = vmax.f32 %v193, 0.0
    %v256 = vmax.f32 %v196, 0.0
    %v257 = vmax.f32 %v201, 0.0
    %v258 = vmax.f32 %v204, 0.0
    %v259 = vmax.f32 %v209, 0.0
    %v260 = vmax.f32 %v212, 0.0
    %v261 = vmax.f32 %v217, 0.0
    %v262 = vmax.f32 %v220, 0.0
    %v263 = vmax.f32 %v225, 0.0
    %v264 = vmax.f32 %v228, 0.0
    %v265 = vmax.f32 %v233, 0.0
    %v266 = vmax.f32 %v236, 0.0
    %v267 = vmax.f32 %v241, 0.0
    %v268 = vmax.f32 %v244, 0.0
    %v269 = vmax.f32 %v249, 0.0
    %v270 = vmax.f32 %v252, 0.0
    %271 = vst.msk [vmem:[#allocation2] sm:$0xff] %vm133, %v255
    %272 = vst.msk [vmem:[#allocation2 + $0x8] sm:$0xff] %vm133, %v256
    %273 = vst.msk [vmem:[#allocation2 + $0x10] sm:$0xff] %vm133, %v257
    %274 = vst.msk [vmem:[#allocation2 + $0x18] sm:$0xff] %vm133, %v258
    %275 = vst.msk [vmem:[#allocation2 + $0x20] sm:$0xff] %vm133, %v259
    %276 = vst.msk [vmem:[#allocation2 + $0x28] sm:$0xff] %vm133, %v260
    %277 = vst.msk [vmem:[#allocation2 + $0x30] sm:$0xff] %vm133, %v261
    %278 = vst.msk [vmem:[#allocation2 + $0x38] sm:$0xff] %vm133, %v262
    %279 = vst.msk [vmem:[#allocation2 + $0x40] sm:$0xff] %vm133, %v263
    %280 = vst.msk [vmem:[#allocation2 + $0x48] sm:$0xff] %vm133, %v264
    %281 = vst.msk [vmem:[#allocation2 + $0x50] sm:$0xff] %vm133, %v265
    %282 = vst.msk [vmem:[#allocation2 + $0x58] sm:$0xff] %vm133, %v266
    %283 = vst.msk [vmem:[#allocation2 + $0x60] sm:$0xff] %vm133, %v267
    %284 = vst.msk [vmem:[#allocation2 + $0x68] sm:$0xff] %vm133, %v268
    %285 = vst.msk [vmem:[#allocation2 + $0x70] sm:$0xff] %vm133, %v269
    %286 = vst.msk [vmem:[#allocation2 + $0x78] sm:$0xff] %vm133, %v270
    %v287 = vld [vmem:[%s3] sm:$0xf]
    %v288 = vld [vmem:[%s3 + $0x4] sm:$0xf]
    %v289 = vld [vmem:[%s3 + $0x8] sm:$0xf]
    %v290 = vld [vmem:[%s3 + $0xc] sm:$0xf]
    %v291 = vld [vmem:[%s4] sm:$0x1]
    %v293 = vlaneseq
    %v294 = vshrl.u32 %v293, 7
    %v295 = vsub.s32 0, %v294
    %v296 = vrot.slane %v291, %v295
    %v302 = vunpack.c.l.b16 %v287
    %v303 = vunpack.c.l.b16 %v288
    %v304 = vunpack.c.l.b16 %v289
    %v305 = vunpack.c.l.b16 %v290
    %v306 = vpack.c.b16 %v303, %v302
    %v307 = vpack.c.b16 %v305, %v304
    %310 = vmatprep.subr.bf16.mxu0 0
    %311 = vmatpush1.bf16.msra.mxu0 0
    %312 = vmatprep.subr.bf16.mxu0 0
    %313 = vmatpush1.bf16.msra.mxu0 0
    %314 = vmatprep.subr.bf16.mxu0 0
    %315 = vmatpush1.bf16.msra.mxu0 0
    %316 = vmatprep.subr.bf16.mxu0 0
    %317 = vmatpush1.bf16.msra.mxu0 0
    %318 = vmatprep.subr.bf16.mxu0 0
    %319 = vmatpush1.bf16.msra.mxu0 0
    %320 = vmatprep.subr.bf16.mxu0 0
    %321 = vmatpush1.bf16.msra.mxu0 0
    %322 = vmatprep.subr.bf16.mxu0 0
    %323 = vmatpush1.bf16.msra.mxu0 %v307
    %324 = vmatprep.subr.bf16.mxu0 0
    %325 = vmatpush1.bf16.msra.mxu0 %v306
    %326 = vmatprep.subr.bf16.mxu0 0
    %327 = vmatpush2.bf16.msra.mxu0 0
    %328 = vmatprep.subr.bf16.mxu0 0
    %329 = vmatpush2.bf16.msra.mxu0 0
    %330 = vmatprep.subr.bf16.mxu0 0
    %331 = vmatpush2.bf16.msra.mxu0 0
    %332 = vmatprep.subr.bf16.mxu0 0
    %333 = vmatpush2.bf16.msra.mxu0 0
    %334 = vmatprep.subr.bf16.mxu0 0
    %335 = vmatpush2.bf16.msra.mxu0 0
    %336 = vmatprep.subr.bf16.mxu0 0
    %337 = vmatpush2.bf16.msra.mxu0 0
    %338 = vmatprep.subr.bf16.mxu0 0
    %339 = vmatpush2.bf16.msra.mxu0 0
    %340 = vmatprep.subr.bf16.mxu0 0
    %341 = vmatpush2.bf16.msra.mxu0 0
    %342 = vmatprep.mubr.bf16.mxu0 0
    %343 = vmatmul.mubr.bf16.gmra.mxu0 %v135
    %v344 = vpop.f32.mrf.mxu0
    %v345 = vadd.f32 %v296, %v344
    %v346 = vpop.f32.mrf.mxu0
    %v347 = vpop.f32.mrf.mxu0
    %v348 = vadd.f32 %v296, %v347
    %v349 = vpop.f32.mrf.mxu0
    %350 = vmatprep.mubr.bf16.mxu0 0
    %351 = vmatmul.mubr.bf16.gmra.mxu0 %v138
    %v352 = vpop.f32.mrf.mxu0
    %v353 = vadd.f32 %v296, %v352
    %v354 = vpop.f32.mrf.mxu0
    %v355 = vpop.f32.mrf.mxu0
    %v356 = vadd.f32 %v296, %v355
    %v357 = vpop.f32.mrf.mxu0
    %358 = vmatprep.mubr.bf16.mxu0 0
    %359 = vmatmul.mubr.bf16.gmra.mxu0 %v141
    %v360 = vpop.f32.mrf.mxu0
    %v361 = vadd.f32 %v296, %v360
    %v362 = vpop.f32.mrf.mxu0
    %v363 = vpop.f32.mrf.mxu0
    %v364 = vadd.f32 %v296, %v363
    %v365 = vpop.f32.mrf.mxu0
    %366 = vmatprep.mubr.bf16.mxu0 0
    %367 = vmatmul.mubr.bf16.gmra.mxu0 %v144
    %v368 = vpop.f32.mrf.mxu0
    %v369 = vadd.f32 %v296, %v368
    %v370 = vpop.f32.mrf.mxu0
    %v371 = vpop.f32.mrf.mxu0
    %v372 = vadd.f32 %v296, %v371
    %v373 = vpop.f32.mrf.mxu0
    %374 = vmatprep.mubr.bf16.mxu0 0
    %375 = vmatmul.mubr.bf16.gmra.mxu0 %v147
    %v376 = vpop.f32.mrf.mxu0
    %v377 = vadd.f32 %v296, %v376
    %v378 = vpop.f32.mrf.mxu0
    %v379 = vpop.f32.mrf.mxu0
    %v380 = vadd.f32 %v296, %v379
    %v381 = vpop.f32.mrf.mxu0
    %382 = vmatprep.mubr.bf16.mxu0 0
    %383 = vmatmul.mubr.bf16.gmra.mxu0 %v150
    %v384 = vpop.f32.mrf.mxu0
    %v385 = vadd.f32 %v296, %v384
    %v386 = vpop.f32.mrf.mxu0
    %v387 = vpop.f32.mrf.mxu0
    %v388 = vadd.f32 %v296, %v387
    %v389 = vpop.f32.mrf.mxu0
    %390 = vmatprep.mubr.bf16.mxu0 0
    %391 = vmatmul.mubr.bf16.gmra.mxu0 %v153
    %v392 = vpop.f32.mrf.mxu0
    %v393 = vadd.f32 %v296, %v392
    %v394 = vpop.f32.mrf.mxu0
    %v395 = vpop.f32.mrf.mxu0
    %v396 = vadd.f32 %v296, %v395
    %v397 = vpop.f32.mrf.mxu0
    %398 = vmatprep.mubr.bf16.mxu0 0
    %399 = vmatmul.mubr.bf16.gmra.mxu0 %v156
    %v400 = vpop.f32.mrf.mxu0
    %v401 = vadd.f32 %v296, %v400
    %v402 = vpop.f32.mrf.mxu0
    %v403 = vpop.f32.mrf.mxu0
    %v404 = vadd.f32 %v296, %v403
    %v405 = vpop.f32.mrf.mxu0
    %406 = vdwg.mxu0
    %v407 = vmax.f32 %v345, 0.0
    %v408 = vmax.f32 %v348, 0.0
    %v409 = vmax.f32 %v353, 0.0
    %v410 = vmax.f32 %v356, 0.0
    %v411 = vmax.f32 %v361, 0.0
    %v412 = vmax.f32 %v364, 0.0
    %v413 = vmax.f32 %v369, 0.0
    %v414 = vmax.f32 %v372, 0.0
    %v415 = vmax.f32 %v377, 0.0
    %v416 = vmax.f32 %v380, 0.0
    %v417 = vmax.f32 %v385, 0.0
    %v418 = vmax.f32 %v388, 0.0
    %v419 = vmax.f32 %v393, 0.0
    %v420 = vmax.f32 %v396, 0.0
    %v421 = vmax.f32 %v401, 0.0
    %v422 = vmax.f32 %v404, 0.0
    %v423 = vld [vmem:[%s5] sm:$0xf]
    %v424 = vld [vmem:[%s5 + $0x4] sm:$0xf]
    %v425 = vld [vmem:[%s5 + $0x8] sm:$0xf]
    %v426 = vld [vmem:[%s5 + $0xc] sm:$0xf]
    %v427 = vpack.c.bf16 %v408, %v407
    %v428 = vpack.c.bf16 %v410, %v409
    %v429 = vpack.c.bf16 %v412, %v411
    %v430 = vpack.c.bf16 %v414, %v413
    %v431 = vpack.c.bf16 %v416, %v415
    %v432 = vpack.c.bf16 %v418, %v417
    %v433 = vpack.c.bf16 %v420, %v419
    %v434 = vpack.c.bf16 %v422, %v421
    %v439 = vunpack.c.l.b16 %v423
    %v440 = vunpack.c.l.b16 %v424
    %v441 = vunpack.c.l.b16 %v425
    %v442 = vunpack.c.l.b16 %v426
    %v443 = vpack.c.b16 %v440, %v439
    %v444 = vpack.c.b16 %v442, %v441
    %447 = vmatprep.subr.bf16.mxu0 0
    %448 = vmatpush1.bf16.msra.mxu0 %v434
    %449 = vmatprep.subr.bf16.mxu0 0
    %450 = vmatpush1.bf16.msra.mxu0 %v433
    %451 = vmatprep.subr.bf16.mxu0 0
    %452 = vmatpush1.bf16.msra.mxu0 %v432
    %453 = vmatprep.subr.bf16.mxu0 0
    %454 = vmatpush1.bf16.msra.mxu0 %v431
    %455 = vmatprep.subr.bf16.mxu0 0
    %456 = vmatpush1.bf16.msra.mxu0 %v430
    %457 = vmatprep.subr.bf16.mxu0 0
    %458 = vmatpush1.bf16.msra.mxu0 %v429
    %459 = vmatprep.subr.bf16.mxu0 0
    %460 = vmatpush1.bf16.msra.mxu0 %v428
    %461 = vmatprep.subr.bf16.mxu0 0
    %462 = vmatpush1.bf16.msra.mxu0 %v427
    %463 = vmatprep.subr.bf16.mxu0 0
    %464 = vmatpush2.bf16.msra.mxu0 0
    %465 = vmatprep.subr.bf16.mxu0 0
    %466 = vmatpush2.bf16.msra.mxu0 0
    %467 = vmatprep.subr.bf16.mxu0 0
    %468 = vmatpush2.bf16.msra.mxu0 0
    %469 = vmatprep.subr.bf16.mxu0 0
    %470 = vmatpush2.bf16.msra.mxu0 0
    %471 = vmatprep.subr.bf16.mxu0 0
    %472 = vmatpush2.bf16.msra.mxu0 0
    %473 = vmatprep.subr.bf16.mxu0 0
    %474 = vmatpush2.bf16.msra.mxu0 0
    %475 = vmatprep.subr.bf16.mxu0 0
    %476 = vmatpush2.bf16.msra.mxu0 0
    %477 = vmatprep.subr.bf16.mxu0 0
    %478 = vmatpush2.bf16.msra.mxu0 0
    %479 = vmatprep.mubr.bf16.mxu0 0
    %480 = vmatmul.mubr.bf16.gmra.mxu0 %v443
    %v481 = vpop.f32.mrf.mxu0
    %v482 = vadd.f32 0.0, %v481
    %v483 = vpop.f32.mrf.mxu0
    %v484 = vpop.f32.mrf.mxu0
    %v485 = vadd.f32 0.0, %v484
    %v486 = vpop.f32.mrf.mxu0
    %487 = vmatprep.mubr.bf16.mxu0 0
    %488 = vmatmul.mubr.bf16.gmra.mxu0 %v444
    %v489 = vpop.f32.mrf.mxu0
    %v490 = vadd.f32 0.0, %v489
    %v491 = vpop.f32.mrf.mxu0
    %v492 = vpop.f32.mrf.mxu0
    %v493 = vadd.f32 0.0, %v492
    %v494 = vpop.f32.mrf.mxu0
    %495 = vdwg.mxu0
    %v496 = vpack.c.bf16 %v485, %v482
    %v497 = vpack.c.bf16 %v493, %v490
    %v498 = vld [vmem:[%s6] sm:$0xf]
    %v499 = vld [vmem:[%s6 + $0x4] sm:$0xf]
    %v500 = vld [vmem:[%s6 + $0x8] sm:$0xf]
    %v501 = vld [vmem:[%s6 + $0xc] sm:$0xf]
    %v502 = vld [vmem:[%s7] sm:$0x1]
    %v504 = vlaneseq
    %v505 = vshrl.u32 %v504, 7
    %v506 = vsub.s32 0, %v505
    %v507 = vrot.slane %v502, %v506
    %v513 = vunpack.c.l.b16 %v498
    %v514 = vunpack.c.l.b16 %v499
    %v515 = vunpack.c.l.b16 %v500
    %v516 = vunpack.c.l.b16 %v501
    %v517 = vpack.c.b16 %v514, %v513
    %v518 = vpack.c.b16 %v516, %v515
    %v522 = vsel %vm133, %v496, 0
    %v525 = vsel %vm133, %v497, 0
    %527 = vmatprep.subr.bf16.mxu0 0
    %528 = vmatpush1.bf16.msra.mxu0 0
    %529 = vmatprep.subr.bf16.mxu0 0
    %530 = vmatpush1.bf16.msra.mxu0 0
    %531 = vmatprep.subr.bf16.mxu0 0
    %532 = vmatpush1.bf16.msra.mxu0 0
    %533 = vmatprep.subr.bf16.mxu0 0
    %534 = vmatpush1.bf16.msra.mxu0 0
    %535 = vmatprep.subr.bf16.mxu0 0
    %536 = vmatpush1.bf16.msra.mxu0 0
    %537 = vmatprep.subr.bf16.mxu0 0
    %538 = vmatpush1.bf16.msra.mxu0 0
    %539 = vmatprep.subr.bf16.mxu0 0
    %540 = vmatpush1.bf16.msra.mxu0 %v518
    %541 = vmatprep.subr.bf16.mxu0 0
    %542 = vmatpush1.bf16.msra.mxu0 %v517
    %543 = vmatprep.subr.bf16.mxu0 0
    %544 = vmatpush2.bf16.msra.mxu0 0
    %545 = vmatprep.subr.bf16.mxu0 0
    %546 = vmatpush2.bf16.msra.mxu0 0
    %547 = vmatprep.subr.bf16.mxu0 0
    %548 = vmatpush2.bf16.msra.mxu0 0
    %549 = vmatprep.subr.bf16.mxu0 0
    %550 = vmatpush2.bf16.msra.mxu0 0
    %551 = vmatprep.subr.bf16.mxu0 0
    %552 = vmatpush2.bf16.msra.mxu0 0
    %553 = vmatprep.subr.bf16.mxu0 0
    %554 = vmatpush2.bf16.msra.mxu0 0
    %555 = vmatprep.subr.bf16.mxu0 0
    %556 = vmatpush2.bf16.msra.mxu0 0
    %557 = vmatprep.subr.bf16.mxu0 0
    %558 = vmatpush2.bf16.msra.mxu0 0
    %559 = vmatprep.mubr.bf16.mxu0 0
    %560 = vmatmul.mubr.bf16.gmra.mxu0 %v522
    %v561 = vpop.f32.mrf.mxu0
    %v562 = vadd.f32 %v507, %v561
    %v563 = vpop.f32.mrf.mxu0
    %v564 = vpop.f32.mrf.mxu0
    %v565 = vadd.f32 %v507, %v564
    %v566 = vpop.f32.mrf.mxu0
    %567 = vmatprep.mubr.bf16.mxu0 0
    %568 = vmatmul.mubr.bf16.gmra.mxu0 %v525
    %v569 = vpop.f32.mrf.mxu0
    %v570 = vadd.f32 %v507, %v569
    %v571 = vpop.f32.mrf.mxu0
    %v572 = vpop.f32.mrf.mxu0
    %v573 = vadd.f32 %v507, %v572
    %v574 = vpop.f32.mrf.mxu0
    %575 = vdwg.mxu0
    %v576 = vld [vmem:[%s8] sm:$0xf]
    %v577 = vld [vmem:[%s8 + $0x4] sm:$0xf]
    %v578 = vld [vmem:[%s8 + $0x8] sm:$0xf]
    %v579 = vld [vmem:[%s8 + $0xc] sm:$0xf]
    %v580 = vld [vmem:[%s9] sm:$0x1]
    %v582 = vlaneseq
    %v583 = vshrl.u32 %v582, 7
    %v584 = vsub.s32 0, %v583
    %v585 = vrot.slane %v580, %v584
    %v591 = vunpack.c.l.b16 %v576
    %v592 = vunpack.c.l.b16 %v577
    %v593 = vunpack.c.l.b16 %v578
    %v594 = vunpack.c.l.b16 %v579
    %v595 = vpack.c.b16 %v592, %v591
    %v596 = vpack.c.b16 %v594, %v593
    %599 = vmatprep.subr.bf16.mxu0 0
    %600 = vmatpush1.bf16.msra.mxu0 0
    %601 = vmatprep.subr.bf16.mxu0 0
    %602 = vmatpush1.bf16.msra.mxu0 0
    %603 = vmatprep.subr.bf16.mxu0 0
    %604 = vmatpush1.bf16.msra.mxu0 0
    %605 = vmatprep.subr.bf16.mxu0 0
    %606 = vmatpush1.bf16.msra.mxu0 0
    %607 = vmatprep.subr.bf16.mxu0 0
    %608 = vmatpush1.bf16.msra.mxu0 0
    %609 = vmatprep.subr.bf16.mxu0 0
    %610 = vmatpush1.bf16.msra.mxu0 0
    %611 = vmatprep.subr.bf16.mxu0 0
    %612 = vmatpush1.bf16.msra.mxu0 %v596
    %613 = vmatprep.subr.bf16.mxu0 0
    %614 = vmatpush1.bf16.msra.mxu0 %v595
    %615 = vmatprep.subr.bf16.mxu0 0
    %616 = vmatpush2.bf16.msra.mxu0 0
    %617 = vmatprep.subr.bf16.mxu0 0
    %618 = vmatpush2.bf16.msra.mxu0 0
    %619 = vmatprep.subr.bf16.mxu0 0
    %620 = vmatpush2.bf16.msra.mxu0 0
    %621 = vmatprep.subr.bf16.mxu0 0
    %622 = vmatpush2.bf16.msra.mxu0 0
    %623 = vmatprep.subr.bf16.mxu0 0
    %624 = vmatpush2.bf16.msra.mxu0 0
    %625 = vmatprep.subr.bf16.mxu0 0
    %626 = vmatpush2.bf16.msra.mxu0 0
    %627 = vmatprep.subr.bf16.mxu0 0
    %628 = vmatpush2.bf16.msra.mxu0 0
    %629 = vmatprep.subr.bf16.mxu0 0
    %630 = vmatpush2.bf16.msra.mxu0 0
    %631 = vmatprep.mubr.bf16.mxu0 0
    %632 = vmatmul.mubr.bf16.gmra.mxu0 %v522
    %v633 = vpop.f32.mrf.mxu0
    %v634 = vadd.f32 %v585, %v633
    %v635 = vpop.f32.mrf.mxu0
    %v636 = vpop.f32.mrf.mxu0
    %v637 = vadd.f32 %v585, %v636
    %v638 = vpop.f32.mrf.mxu0
    %639 = vmatprep.mubr.bf16.mxu0 0
    %640 = vmatmul.mubr.bf16.gmra.mxu0 %v525
    %v641 = vpop.f32.mrf.mxu0
    %v642 = vadd.f32 %v585, %v641
    %v643 = vpop.f32.mrf.mxu0
    %v644 = vpop.f32.mrf.mxu0
    %v645 = vadd.f32 %v585, %v644
    %v646 = vpop.f32.mrf.mxu0
    %647 = vdwg.mxu0
    %v648 = vxor.u32 %v634, 2147483648
    %v649 = vxor.u32 %v637, 2147483648
    %v650 = vxor.u32 %v642, 2147483648
    %v651 = vxor.u32 %v645, 2147483648
    %v652 = vmul.f32 %v648, 1.442695
    %v653 = vpow.pop %v652
    %v654 = vmul.f32 %v649, 1.442695
    %v655 = vpow.pop %v654
    %v656 = vmul.f32 %v650, 1.442695
    %v657 = vpow.pop %v656
    %v658 = vmul.f32 %v651, 1.442695
    %v659 = vpow.pop %v658
    %v660 = vadd.f32 %v653, 1.0
    %v661 = vadd.f32 %v655, 1.0
    %v662 = vadd.f32 %v657, 1.0
    %v663 = vadd.f32 %v659, 1.0
    %v664 = vrcp.pop %v660
    %v665 = vmul.f32 1.0, %v664
    %v666 = vrcp.pop %v661
    %v667 = vmul.f32 1.0, %v666
    %v668 = vrcp.pop %v662
    %v669 = vmul.f32 1.0, %v668
    %v670 = vrcp.pop %v663
    %v671 = vmul.f32 1.0, %v670
    %v672 = vxor.u32 %v562, 2147483648
    %v673 = vxor.u32 %v565, 2147483648
    %v674 = vxor.u32 %v570, 2147483648
    %v675 = vxor.u32 %v573, 2147483648
    %v676 = vmul.f32 %v672, 1.442695
    %v677 = vpow.pop %v676
    %v678 = vmul.f32 %v673, 1.442695
    %v679 = vpow.pop %v678
    %v680 = vmul.f32 %v674, 1.442695
    %v681 = vpow.pop %v680
    %v682 = vmul.f32 %v675, 1.442695
    %v683 = vpow.pop %v682
    %v684 = vadd.f32 %v677, 1.0
    %v685 = vadd.f32 %v679, 1.0
    %v686 = vadd.f32 %v681, 1.0
    %v687 = vadd.f32 %v683, 1.0
    %v688 = vrcp.pop %v684
    %v689 = vmul.f32 1.0, %v688
    %v690 = vrcp.pop %v685
    %v691 = vmul.f32 1.0, %v690
    %v692 = vrcp.pop %v686
    %v693 = vmul.f32 1.0, %v692
    %v694 = vrcp.pop %v687
    %v695 = vmul.f32 1.0, %v694
    %vm696 = vcmask 64512
    %v697 = vsel %vm696, %v689, -inf
    %698 = vmax.xlane.f32.xlu0 %v697
    %v699 = vpop.xlane.xlu0 %698
    %v700 = vsel %vm696, %v691, -inf
    %701 = vmax.xlane.f32.xlu0 %v700
    %v702 = vpop.xlane.xlu0 %701
    %v703 = vsel %vm696, %v693, -inf
    %704 = vmax.xlane.f32.xlu0 %v703
    %v705 = vpop.xlane.xlu0 %704
    %v706 = vsel %vm696, %v695, -inf
    %707 = vmax.xlane.f32.xlu0 %v706
    %v708 = vpop.xlane.xlu0 %707
    %v709 = vld [vmem:[%s10] sm:$0x1]
    %v711 = vlaneseq
    %v712 = vshrl.u32 %v711, 7
    %v713 = vsub.s32 0, %v712
    %v714 = vrot.slane %v709, %v713
    %v716 = vmul.f32 %v665, %v714
    %v717 = vmul.f32 %v667, %v714
    %v718 = vmul.f32 %v669, %v714
    %v719 = vmul.f32 %v671, %v714
    %v720 = vpack.c.bf16 %v565, %v562
    %v721 = vpack.c.bf16 %v573, %v570
    %v722 = vld [vmem:[%s11] sm:$0xf]
    %v723 = vld [vmem:[%s12] sm:$0x1]
    %v725 = vlaneseq
    %v726 = vshrl.u32 %v725, 7
    %v727 = vsub.s32 0, %v726
    %v728 = vrot.slane %v723, %v727
    %v731 = vsel %vm696, %v720, 0
    %v734 = vsel %vm696, %v721, 0
    %vm736 = vcmask 1043456
    %v738 = vsel %vm736, %v722, 0
    %740 = vmatprep.subr.bf16.mxu0 0
    %741 = vmatpush1.bf16.msra.mxu0 0
    %742 = vmatprep.subr.bf16.mxu0 0
    %743 = vmatpush1.bf16.msra.mxu0 0
    %744 = vmatprep.subr.bf16.mxu0 0
    %745 = vmatpush1.bf16.msra.mxu0 0
    %746 = vmatprep.subr.bf16.mxu0 0
    %747 = vmatpush1.bf16.msra.mxu0 0
    %748 = vmatprep.subr.bf16.mxu0 0
    %749 = vmatpush1.bf16.msra.mxu0 0
    %750 = vmatprep.subr.bf16.mxu0 0
    %751 = vmatpush1.bf16.msra.mxu0 0
    %752 = vmatprep.subr.bf16.mxu0 0
    %753 = vmatpush1.bf16.msra.mxu0 0
    %754 = vmatprep.subr.bf16.mxu0 0
    %755 = vmatpush1.bf16.msra.mxu0 %v738
    %756 = vmatprep.subr.bf16.mxu0 0
    %757 = vmatpush2.bf16.msra.mxu0 0
    %758 = vmatprep.subr.bf16.mxu0 0
    %759 = vmatpush2.bf16.msra.mxu0 0
    %760 = vmatprep.subr.bf16.mxu0 0
    %761 = vmatpush2.bf16.msra.mxu0 0
    %762 = vmatprep.subr.bf16.mxu0 0
    %763 = vmatpush2.bf16.msra.mxu0 0
    %764 = vmatprep.subr.bf16.mxu0 0
    %765 = vmatpush2.bf16.msra.mxu0 0
    %766 = vmatprep.subr.bf16.mxu0 0
    %767 = vmatpush2.bf16.msra.mxu0 0
    %768 = vmatprep.subr.bf16.mxu0 0
    %769 = vmatpush2.bf16.msra.mxu0 0
    %770 = vmatprep.subr.bf16.mxu0 0
    %771 = vmatpush2.bf16.msra.mxu0 0
    %772 = vmatprep.mubr.bf16.mxu0 0
    %773 = vmatmul.mubr.bf16.gmra.mxu0 %v731
    %v774 = vpop.f32.mrf.mxu0
    %v775 = vadd.f32 %v728, %v774
    %v776 = vpop.f32.mrf.mxu0
    %v777 = vpop.f32.mrf.mxu0
    %v778 = vadd.f32 %v728, %v777
    %v779 = vpop.f32.mrf.mxu0
    %780 = vmatprep.mubr.bf16.mxu0 0
    %781 = vmatmul.mubr.bf16.gmra.mxu0 %v734
    %v782 = vpop.f32.mrf.mxu0
    %v783 = vadd.f32 %v728, %v782
    %v784 = vpop.f32.mrf.mxu0
    %v785 = vpop.f32.mrf.mxu0
    %v786 = vadd.f32 %v728, %v785
    %v787 = vpop.f32.mrf.mxu0
    %788 = vdwg.mxu0
    %v789 = vmax.f32 %v775, 0.0
    %v790 = vmax.f32 %v778, 0.0
    %v791 = vmax.f32 %v783, 0.0
    %v792 = vmax.f32 %v786, 0.0
    %v793 = vpack.c.bf16 %v790, %v789
    %v794 = vpack.c.bf16 %v792, %v791
    %v795 = vld [vmem:[%s13] sm:$0xf]
    %v796 = vld [vmem:[%s13 + $0x4] sm:$0xf]
    %v797 = vld [vmem:[%s13 + $0x8] sm:$0xf]
    %v798 = vld [vmem:[%s13 + $0xc] sm:$0xf]
    %v799 = vld [vmem:[%s13 + $0x10] sm:$0xf]
    %v800 = vld [vmem:[%s13 + $0x14] sm:$0xf]
    %v801 = vld [vmem:[%s13 + $0x18] sm:$0xf]
    %v802 = vld [vmem:[%s13 + $0x1c] sm:$0xf]
    %v811 = vunpack.c.l.b16 %v795
    %v812 = vunpack.c.l.b16 %v796
    %v813 = vunpack.c.l.b16 %v797
    %v814 = vunpack.c.l.b16 %v798
    %v815 = vunpack.c.l.b16 %v799
    %v816 = vunpack.c.l.b16 %v800
    %v817 = vunpack.c.l.b16 %v801
    %v818 = vunpack.c.l.b16 %v802
    %v819 = vpack.c.b16 %v812, %v811
    %v820 = vpack.c.b16 %v814, %v813
    %v821 = vpack.c.b16 %v816, %v815
    %v822 = vpack.c.b16 %v818, %v817
    %vm827 = vcmask 523264
    %v829 = vsel %vm827, %v793, 0
    %v832 = vsel %vm827, %v794, 0
    %834 = vmatprep.subr.bf16.mxu0 0
    %835 = vmatpush1.bf16.msra.mxu0 0
    %836 = vmatprep.subr.bf16.mxu0 0
    %837 = vmatpush1.bf16.msra.mxu0 0
    %838 = vmatprep.subr.bf16.mxu0 0
    %839 = vmatpush1.bf16.msra.mxu0 0
    %840 = vmatprep.subr.bf16.mxu0 0
    %841 = vmatpush1.bf16.msra.mxu0 0
    %842 = vmatprep.subr.bf16.mxu0 0
    %843 = vmatpush1.bf16.msra.mxu0 %v822
    %844 = vmatprep.subr.bf16.mxu0 0
    %845 = vmatpush1.bf16.msra.mxu0 %v821
    %846 = vmatprep.subr.bf16.mxu0 0
    %847 = vmatpush1.bf16.msra.mxu0 %v820
    %848 = vmatprep.subr.bf16.mxu0 0
    %849 = vmatpush1.bf16.msra.mxu0 %v819
    %850 = vmatprep.subr.bf16.mxu0 0
    %851 = vmatpush2.bf16.msra.mxu0 0
    %852 = vmatprep.subr.bf16.mxu0 0
    %853 = vmatpush2.bf16.msra.mxu0 0
    %854 = vmatprep.subr.bf16.mxu0 0
    %855 = vmatpush2.bf16.msra.mxu0 0
    %856 = vmatprep.subr.bf16.mxu0 0
    %857 = vmatpush2.bf16.msra.mxu0 0
    %858 = vmatprep.subr.bf16.mxu0 0
    %859 = vmatpush2.bf16.msra.mxu0 0
    %860 = vmatprep.subr.bf16.mxu0 0
    %861 = vmatpush2.bf16.msra.mxu0 0
    %862 = vmatprep.subr.bf16.mxu0 0
    %863 = vmatpush2.bf16.msra.mxu0 0
    %864 = vmatprep.subr.bf16.mxu0 0
    %865 = vmatpush2.bf16.msra.mxu0 0
    %866 = vmatprep.mubr.bf16.mxu0 0
    %867 = vmatmul.mubr.bf16.gmra.mxu0 %v829
    %v868 = vpop.f32.mrf.mxu0
    %v869 = vadd.f32 0.0, %v868
    %v870 = vpop.f32.mrf.mxu0
    %v871 = vpop.f32.mrf.mxu0
    %v872 = vadd.f32 0.0, %v871
    %v873 = vpop.f32.mrf.mxu0
    %874 = vmatprep.mubr.bf16.mxu0 0
    %875 = vmatmul.mubr.bf16.gmra.mxu0 %v832
    %v876 = vpop.f32.mrf.mxu0
    %v877 = vadd.f32 0.0, %v876
    %v878 = vpop.f32.mrf.mxu0
    %v879 = vpop.f32.mrf.mxu0
    %v880 = vadd.f32 0.0, %v879
    %v881 = vpop.f32.mrf.mxu0
    %882 = vdwg.mxu0
    %v883 = vmul.f32 %v789, %v789
    %v884 = vmul.f32 %v790, %v790
    %v885 = vmul.f32 %v791, %v791
    %v886 = vmul.f32 %v792, %v792
    %v887 = vsel %vm827, %v883, 0.0
    %888 = vadd.xlane.f32.xlu0 %v887
    %v889 = vpop.xlane.xlu0 %888
    %v890 = vsel %vm827, %v884, 0.0
    %891 = vadd.xlane.f32.xlu0 %v890
    %v892 = vpop.xlane.xlu0 %891
    %v893 = vsel %vm827, %v885, 0.0
    %894 = vadd.xlane.f32.xlu0 %v893
    %v895 = vpop.xlane.xlu0 %894
    %v896 = vsel %vm827, %v886, 0.0
    %897 = vadd.xlane.f32.xlu0 %v896
    %v898 = vpop.xlane.xlu0 %897
    %v899 = vadd.f32 %v889, 1e-12
    %v900 = vadd.f32 %v892, 1e-12
    %v901 = vadd.f32 %v895, 1e-12
    %v902 = vadd.f32 %v898, 1e-12
    %v903 = vrsqrt.pop %v899
    %v904 = vrsqrt.pop %v900
    %v905 = vrsqrt.pop %v901
    %v906 = vrsqrt.pop %v902
    %v907 = vmul.f32 %v869, %v903
    %v908 = vmul.f32 %v872, %v904
    %v909 = vmul.f32 %v877, %v905
    %v910 = vmul.f32 %v880, %v906
    %v911 = vld [vmem:[%s14] sm:$0x1]
    %v913 = vlaneseq
    %v914 = vshrl.u32 %v913, 7
    %v915 = vsub.s32 0, %v914
    %v916 = vrot.slane %v911, %v915
    %v918 = vmul.f32 %v907, %v916
    %v919 = vmul.f32 %v908, %v916
    %v920 = vmul.f32 %v909, %v916
    %v921 = vmul.f32 %v910, %v916
    %v922 = vsel %vm696, %v918, -inf
    %923 = vmax.xlane.f32.xlu0 %v922
    %v924 = vpop.xlane.xlu0 %923
    %v925 = vsel %vm696, %v919, -inf
    %926 = vmax.xlane.f32.xlu0 %v925
    %v927 = vpop.xlane.xlu0 %926
    %v928 = vsel %vm696, %v920, -inf
    %929 = vmax.xlane.f32.xlu0 %v928
    %v930 = vpop.xlane.xlu0 %929
    %v931 = vsel %vm696, %v921, -inf
    %932 = vmax.xlane.f32.xlu0 %v931
    %v933 = vpop.xlane.xlu0 %932
    %v934 = vlaneseq
    %v935 = vand.u32 %v934, 127
    %v936 = vcvt.s32.f32 %v935
    %vm937 = vcmp.ge.f32.partialorder %v918, %v924
    %vm938 = vcmp.ge.f32.partialorder %v919, %v927
    %vm939 = vcmp.ge.f32.partialorder %v920, %v930
    %vm940 = vcmp.ge.f32.partialorder %v921, %v933
    %v941 = vsel %vm937, %v936, 8.0
    %v942 = vsel %vm938, %v936, 8.0
    %v943 = vsel %vm939, %v936, 8.0
    %v944 = vsel %vm940, %v936, 8.0
    %v945 = vsel %vm696, %v941, inf
    %946 = vmin.xlane.f32.xlu0 %v945
    %v947 = vpop.xlane.xlu0 %946
    %v948 = vsel %vm696, %v942, inf
    %949 = vmin.xlane.f32.xlu0 %v948
    %v950 = vpop.xlane.xlu0 %949
    %v951 = vsel %vm696, %v943, inf
    %952 = vmin.xlane.f32.xlu0 %v951
    %v953 = vpop.xlane.xlu0 %952
    %v954 = vsel %vm696, %v944, inf
    %955 = vmin.xlane.f32.xlu0 %v954
    %v956 = vpop.xlane.xlu0 %955
    %vm957 = vcmp.gt.f32.partialorder %v924, 0.1
    %vm958 = vcmp.gt.f32.partialorder %v927, 0.1
    %vm959 = vcmp.gt.f32.partialorder %v930, 0.1
    %vm960 = vcmp.gt.f32.partialorder %v933, 0.1
    %v961 = vsel %vm957, %v947, -1.0
    %v962 = vsel %vm958, %v950, -1.0
    %v963 = vsel %vm959, %v953, -1.0
    %v964 = vsel %vm960, %v956, -1.0
    %969 = vrot.lane.b32.xlu0 %v716, 126
    %v970 = vpop.permute.xlu0 %969
    %971 = vrot.lane.b32.xlu0 %v717, 126
    %v972 = vpop.permute.xlu0 %971
    %973 = vrot.lane.b32.xlu0 %v718, 126
    %v974 = vpop.permute.xlu0 %973
    %975 = vrot.lane.b32.xlu0 %v719, 126
    %v976 = vpop.permute.xlu0 %975
    %v981 = vsub.f32 %v716, %v970
    %v982 = vsub.f32 %v717, %v972
    %v983 = vsub.f32 %v718, %v974
    %v984 = vsub.f32 %v719, %v976
    %v985 = vadd.f32 %v716, %v970
    %v986 = vadd.f32 %v717, %v972
    %v987 = vadd.f32 %v718, %v974
    %v988 = vadd.f32 %v719, %v976
    %993 = vrot.lane.b32.xlu0 %v985, 2
    %v994 = vpop.permute.xlu0 %993
    %995 = vrot.lane.b32.xlu0 %v986, 2
    %v996 = vpop.permute.xlu0 %995
    %997 = vrot.lane.b32.xlu0 %v987, 2
    %v998 = vpop.permute.xlu0 %997
    %999 = vrot.lane.b32.xlu0 %v988, 2
    %v1000 = vpop.permute.xlu0 %999
    %vm1005 = vcmask 15360
    %v1006 = vsel %vm1005, %v981, %v994
    %v1007 = vsel %vm1005, %v982, %v996
    %v1008 = vsel %vm1005, %v983, %v998
    %v1009 = vsel %vm1005, %v984, %v1000
    %vm1010 = vcmask 31744
    %v1011 = vsel %vm1010, %v1006, %v699
    %v1012 = vsel %vm1010, %v1007, %v702
    %v1013 = vsel %vm1010, %v1008, %v705
    %v1014 = vsel %vm1010, %v1009, %v708
    %vm1015 = vcmask 39936
    %v1016 = vsel %vm1015, %v1011, %v961
    %v1017 = vsel %vm1015, %v1012, %v962
    %v1018 = vsel %vm1015, %v1013, %v963
    %v1019 = vsel %vm1015, %v1014, %v964
    %vm1020 = vcmask 48128
    %v1021 = vsel %vm1020, %v1016, %v924
    %v1022 = vsel %vm1020, %v1017, %v927
    %v1023 = vsel %vm1020, %v1018, %v930
    %v1024 = vsel %vm1020, %v1019, %v933
    %vm1025 = vcmask 56320
    %v1026 = vsel %vm1025, %v1021, 0.0
    %v1027 = vsel %vm1025, %v1022, 0.0
    %v1028 = vsel %vm1025, %v1023, 0.0
    %v1029 = vsel %vm1025, %v1024, 0.0
    %1030 = vst.msk [vmem:[%s16] sm:$0xff] %vm696, %v1026
    %1031 = vst.msk [vmem:[%s16 + $0x8] sm:$0xff] %vm696, %v1027
    %1032 = vst.msk [vmem:[%s16 + $0x10] sm:$0xff] %vm696, %v1028
    %1033 = vst.msk [vmem:[%s16 + $0x18] sm:$0xff] %vm696, %v1029
    // Predicated region
    $region62: #{forward.1} parent=1 // pred_check
      _
    $region63: #{forward.1} parent=1 // pred_check_branch
      %1035 = sbr.rel (0) target = $region65
    $region64: #{forward.1} parent=1 // pred_region
      %s1037 = ssub.s32 2048, 2048
      %1038 = vsyncadd [#allocation3], %s1037
      %s1039 = sshll.u32 [#allocation2], 4
      %s1040 = int_to_ptr.vmem [resolvable:$true] %s1039
      %1045 = dma.vmem_to_hbm [thread:$0]  %s1040, 2048, %s15, [#allocation3], 128, 128, 8
    $region65: #{forward.1} parent=1 // pred_fallthru
      _
    // Predicated region
    $region66: #{forward.1} parent=1 // pred_check
      _
    $region67: #{forward.1} parent=1 // pred_check_branch
      %1047 = sbr.rel (0) target = $region69
    $region68: #{forward.1} parent=1 // pred_region
      _
    $region69: #{forward.1} parent=1 // pred_fallthru
      _
    // Predicated region
    $region70: #{forward.1} parent=1 // pred_check
      _
    $region71: #{forward.1} parent=1 // pred_check_branch
      %1049 = sbr.rel (0) target = $region73
    $region72: #{forward.1} parent=1 // pred_region
      %1050 = dma.done [#allocation3], 2048
    $region73: #{forward.1} parent=1 // pred_fallthru
      _
    // Predicated region
    $region74: #{forward.1} parent=1 // pred_check
      _
    $region75: #{forward.1} parent=1 // pred_check_branch
      %1052 = sbr.rel (0) target = $region77
    $region76: #{forward.1} parent=1 // pred_region
      _
    $region77: #{forward.1} parent=1 // pred_fallthru
      _
    %1053 = vsyncpa [#allocation3], 1

</llo_original>
